<compile_context>
chip_gen: v6e
topology: v6e:2x2x1
jax: 0.10.0
libtpu: 0.0.40
codegen_flags: <defaults>
</compile_context>

<pallas_src>
import math

import jax
import jax.numpy as jnp
from jax import lax
from jax.experimental import pallas as pl
from jax.experimental.pallas import tpu as pltpu

EPS = 1e-8
_INV_SQRT2 = 1.0 / math.sqrt(2.0)


def _gelu(x):
    # exact erf-based gelu (matches the reference `gelu`)
    return x * 0.5 * (1.0 + lax.erf(x * _INV_SQRT2))


# ---------------- Fused Pallas kernel ----------------

def fused_branch_kernel(x_ref, w1_ref, b1_ref, w2_ref, b2_ref, wp_ref, bp_ref,
                        feat_ref, pred_ref):
    # Contract on the in_features axis of both operands: x @ W^T without a
    # transpose in the kernel (feeds the MXU directly, frees the XLU slot).
    contract_last = (((1,), (1,)), ((), ()))

    x = x_ref[...]
    b1 = b1_ref[...]
    b2 = b2_ref[...]
    bp = bp_ref[...]

    # denseL1 + exact gelu
    h = lax.dot_general(x, w1_ref[...], contract_last,
                        preferred_element_type=jnp.float32) + b1
    h = _gelu(h)

    # denseL2; TODO(synk): Dropout treated as identity (eval/inference mode).
    f = lax.dot_general(h, w2_ref[...], contract_last,
                        preferred_element_type=jnp.float32) + b2

    # row-wise l2norm (dim=1): eps stays on the norm (sqrt(sum)+eps) to match
    # the torch reference; the divide becomes an EUP reciprocal.
    f_norm = jnp.sqrt(jnp.sum(f * f, axis=1, keepdims=True)) + EPS
    feat = f * pl.reciprocal(f_norm, approx=True)
    feat_ref[...] = feat

    # predictLayer with l2norm(weight, dim=-1) computed in-kernel: wp is loaded
    # into VMEM once per step and never round-trips through HBM normalized.
    wp = wp_ref[...]
    wp_norm = jnp.sqrt(jnp.sum(wp * wp, axis=1, keepdims=True)) + EPS
    wp_n = wp * pl.reciprocal(wp_norm, approx=True)
    pred_ref[...] = lax.dot_general(feat, wp_n, contract_last,
                                    preferred_element_type=jnp.float32) + bp


def fused_branches(x_s, w1_s, b1_s, w2_s, b2_s, wp, bp):
    """x_s:(2,B,Din) w1_s:(2,Dmid,Din) b1_s:(2,1,Dmid) w2_s:(2,Dfeat,Dmid)
       b2_s:(2,1,Dfeat) wp:(C,Dfeat) bp:(1,C) -> feat:(2,B,Dfeat), pred:(2,B,C)"""
    _, B, Din = x_s.shape
    Dmid = w1_s.shape[1]
    Dfeat = w2_s.shape[1]
    C = wp.shape[0]

    grid_spec = pltpu.PrefetchScalarGridSpec(
        num_scalar_prefetch=0,
        grid=(2,),  # one grid step per branch (img / text)
        in_specs=[
            pl.BlockSpec((None, B, Din), lambda i: (i, 0, 0)),
            pl.BlockSpec((None, Dmid, Din), lambda i: (i, 0, 0)),
            pl.BlockSpec((None, 1, Dmid), lambda i: (i, 0, 0)),
            pl.BlockSpec((None, Dfeat, Dmid), lambda i: (i, 0, 0)),
            pl.BlockSpec((None, 1, Dfeat), lambda i: (i, 0, 0)),
            pl.BlockSpec((C, Dfeat), lambda i: (0, 0)),   # shared predict weight
            pl.BlockSpec((1, C), lambda i: (0, 0)),       # shared predict bias
        ],
        out_specs=[
            pl.BlockSpec((None, B, Dfeat), lambda i: (i, 0, 0)),
            pl.BlockSpec((None, B, C), lambda i: (i, 0, 0)),
        ],
    )

    return pl.pallas_call(
        fused_branch_kernel,
        out_shape=(
            jax.ShapeDtypeStruct((2, B, Dfeat), jnp.float32),
            jax.ShapeDtypeStruct((2, B, C), jnp.float32),
        ),
        grid_spec=grid_spec,
        compiler_params=pltpu.CompilerParams(
            dimension_semantics=("parallel",)),  # v7x: one branch per TensorCore
    )(x_s, w1_s, b1_s, w2_s, b2_s, wp, bp)


# ---------------- Wrappers ----------------

def pack_params(p):
    """One-time packing: stack the two branches (zero-padding the first-layer
    input width if img_dim != text_dim — zero columns in W1 keep x@W1^T exact)
    so the fused kernel can treat the branch index as a grid axis."""
    din = max(p["img_w1"].shape[1], p["text_w1"].shape[1])

    def pad_cols(a):
        d = din - a.shape[-1]
        return a if d == 0 else jnp.pad(a, ((0, 0), (0, d)))

    return dict(
        w1_s=jnp.stack([pad_cols(p["img_w1"]), pad_cols(p["text_w1"])]),
        b1_s=jnp.stack([p["img_b1"].reshape(1, -1), p["text_b1"].reshape(1, -1)]),
        w2_s=jnp.stack([p["img_w2"], p["text_w2"]]),
        b2_s=jnp.stack([p["img_b2"].reshape(1, -1), p["text_b2"].reshape(1, -1)]),
        wp=p["wp"],
        bp=p["bp"].reshape(1, -1),
        centers=p["centers"],
    )


def model_forward(packed, img, text):
    img = img.astype(jnp.float32)
    text = text.astype(jnp.float32)
    din = packed["w1_s"].shape[2]

    def pad_cols(a):
        d = din - a.shape[-1]
        return a if d == 0 else jnp.pad(a, ((0, 0), (0, d)))

    x_s = jnp.stack([pad_cols(img), pad_cols(text)])

    feat_s, pred_s = fused_branches(
        x_s, packed["w1_s"], packed["b1_s"], packed["w2_s"], packed["b2_s"],
        packed["wp"], packed["bp"])

    # centers <- l2norm(centers, dim=0): tiny, keep in plain XLA (no launch).
    centers = packed["centers"]
    c_norm = jnp.sqrt(jnp.sum(centers * centers, axis=0, keepdims=True)) + EPS
    centers_n = centers / c_norm

    return centers_n, feat_s[0], feat_s[1], pred_s[0], pred_s[1]


# ---------------- Deterministic parameter init ----------------

def init_params(key, num_class, img_dim, text_dim, mid_dim, feature_dim):
    ks = jax.random.split(key, 12)

    def linear(kw, kb, out_dim, in_dim):
        bound = 1.0 / math.sqrt(in_dim)
        w = jax.random.uniform(kw, (out_dim, in_dim), jnp.float32, -bound, bound)
        b = jax.random.uniform(kb, (out_dim,), jnp.float32, -bound, bound)
        return w, b

    img_w1, img_b1 = linear(ks[0], ks[1], mid_dim, img_dim)
    img_w2, img_b2 = linear(ks[2], ks[3], feature_dim, mid_dim)
    text_w1, text_b1 = linear(ks[4], ks[5], mid_dim, text_dim)
    text_w2, text_b2 = linear(ks[6], ks[7], feature_dim, mid_dim)

    # predictLayer: kaiming_normal_(mode='fan_out') -> std = sqrt(2 / out_features)
    wp = jax.random.normal(ks[8], (num_class, feature_dim), jnp.float32) * math.sqrt(
        2.0 / num_class)
    bp = jax.random.uniform(ks[9], (num_class,), jnp.float32,
                            -1.0 / math.sqrt(feature_dim), 1.0 / math.sqrt(feature_dim))
    # centers: (feature_dim, num_class), kaiming_normal_(mode='fan_out')
    centers = jax.random.normal(ks[10], (feature_dim, num_class), jnp.float32) * math.sqrt(
        2.0 / feature_dim)

    return dict(
        img_w1=img_w1, img_b1=img_b1, img_w2=img_w2, img_b2=img_b2,
        text_w1=text_w1, text_b1=text_b1, text_w2=text_w2, text_b2=text_b2,
        wp=wp, bp=bp, centers=centers,
    )


if __name__ == "__main__":
    num_class = 8
    img_dim = 32
    text_dim = 32
    mid_dim = 16
    feature_dim = 32
    batch = 4

    key = jax.random.PRNGKey(0)
    pkey, ikey, tkey = jax.random.split(key, 3)

    params = init_params(pkey, num_class, img_dim, text_dim, mid_dim, feature_dim)
    packed = pack_params(params)

    img = jax.random.normal(ikey, (batch, img_dim), jnp.float32)
    text = jax.random.normal(tkey, (batch, text_dim), jnp.float32)

    forward = jax.jit(model_forward)
    centers, img_feat, text_feat, img_pred, text_pred = forward(packed, img, text)
    jax.block_until_ready((centers, img_feat, text_feat, img_pred, text_pred))

    assert centers.shape == (feature_dim, num_class)
    assert img_feat.shape == (batch, feature_dim)
    assert text_feat.shape == (batch, feature_dim)
    assert img_pred.shape == (batch, num_class)
    assert text_pred.shape == (batch, num_class)
    assert bool(jnp.all(jnp.isfinite(img_pred))) and bool(jnp.all(jnp.isfinite(text_pred)))

    print("KERNEL_OK")
</pallas_src>

<mosaic_0001>
module attributes {stable_mosaic.version = 11 : i64} {
  func.func @fused_branch_kernel(%arg0: i32, %arg1: memref<1x4x32xf32, #tpu.memory_space<vmem>>, %arg2: memref<1x16x32xf32, #tpu.memory_space<vmem>>, %arg3: memref<1x1x16xf32, #tpu.memory_space<vmem>>, %arg4: memref<1x32x16xf32, #tpu.memory_space<vmem>>, %arg5: memref<1x1x32xf32, #tpu.memory_space<vmem>>, %arg6: memref<8x32xf32, #tpu.memory_space<vmem>>, %arg7: memref<1x8xf32, #tpu.memory_space<vmem>>, %arg8: memref<1x4x32xf32, #tpu.memory_space<vmem>>, %arg9: memref<1x4x8xf32, #tpu.memory_space<vmem>>) attributes {dimension_semantics = [#tpu.dimension_semantics<parallel>], iteration_bounds = array<i64: 2>, scalar_prefetch = 0 : i64, scratch_operands = 0 : i64, tpu.core_type = #tpu.core_type<tc>, window_params = [{transform_indices = @transform_0, window_bounds = array<i64: 1, 4, 32>}, {transform_indices = @transform_1, window_bounds = array<i64: 1, 16, 32>}, {transform_indices = @transform_2, window_bounds = array<i64: 1, 1, 16>}, {transform_indices = @transform_3, window_bounds = array<i64: 1, 32, 16>}, {transform_indices = @transform_4, window_bounds = array<i64: 1, 1, 32>}, {pipeline_mode = #tpu.pipeline_mode<synchronous>, transform_indices = @transform_5, window_bounds = array<i64: 8, 32>}, {pipeline_mode = #tpu.pipeline_mode<synchronous>, transform_indices = @transform_6, window_bounds = array<i64: 1, 8>}, {transform_indices = @transform_7, window_bounds = array<i64: 1, 4, 32>}, {transform_indices = @transform_8, window_bounds = array<i64: 1, 4, 8>}]} {
    %c0 = arith.constant 0 : index
    %c0_0 = arith.constant 0 : index
    %c0_1 = arith.constant 0 : index
    %0 = vector.load %arg1[%c0, %c0_0, %c0_1] : memref<1x4x32xf32, #tpu.memory_space<vmem>>, vector<1x4x32xf32>
    %1 = vector.shape_cast %0 : vector<1x4x32xf32> to vector<4x32xf32>
    %c0_2 = arith.constant 0 : index
    %c0_3 = arith.constant 0 : index
    %c0_4 = arith.constant 0 : index
    %2 = vector.load %arg3[%c0_2, %c0_3, %c0_4] : memref<1x1x16xf32, #tpu.memory_space<vmem>>, vector<1x1x16xf32>
    %3 = vector.shape_cast %2 : vector<1x1x16xf32> to vector<1x16xf32>
    %c0_5 = arith.constant 0 : index
    %c0_6 = arith.constant 0 : index
    %c0_7 = arith.constant 0 : index
    %4 = vector.load %arg5[%c0_5, %c0_6, %c0_7] : memref<1x1x32xf32, #tpu.memory_space<vmem>>, vector<1x1x32xf32>
    %5 = vector.shape_cast %4 : vector<1x1x32xf32> to vector<1x32xf32>
    %c0_8 = arith.constant 0 : index
    %c0_9 = arith.constant 0 : index
    %6 = vector.load %arg7[%c0_8, %c0_9] : memref<1x8xf32, #tpu.memory_space<vmem>>, vector<1x8xf32>
    %c0_10 = arith.constant 0 : index
    %c0_11 = arith.constant 0 : index
    %c0_12 = arith.constant 0 : index
    %7 = vector.load %arg2[%c0_10, %c0_11, %c0_12] : memref<1x16x32xf32, #tpu.memory_space<vmem>>, vector<1x16x32xf32>
    %8 = vector.shape_cast %7 : vector<1x16x32xf32> to vector<16x32xf32>
    %cst = arith.constant dense<0.000000e+00> : vector<4x16xf32>
    %9 = tpu.matmul %1, %8, %cst {dimension_numbers = #tpu.dot_dimension_numbers<[1], [1], [0], [0], [0, 0, 1, 0], [], []>} : vector<4x32xf32>, vector<16x32xf32>, vector<4x16xf32> -> vector<4x16xf32>
    %10 = vector.broadcast %3 : vector<1x16xf32> to vector<4x16xf32>
    %11 = arith.addf %9, %10 : vector<4x16xf32>
    %cst_13 = arith.constant 5.000000e-01 : f32
    %12 = vector.broadcast %cst_13 : f32 to vector<4x16xf32>
    %13 = arith.mulf %11, %12 : vector<4x16xf32>
    %cst_14 = arith.constant 0.707106769 : f32
    %14 = vector.broadcast %cst_14 : f32 to vector<4x16xf32>
    %15 = arith.mulf %11, %14 : vector<4x16xf32>
    %16 = math.erf %15 : vector<4x16xf32>
    %cst_15 = arith.constant 1.000000e+00 : f32
    %17 = vector.broadcast %cst_15 : f32 to vector<4x16xf32>
    %18 = arith.addf %17, %16 : vector<4x16xf32>
    %19 = arith.mulf %13, %18 : vector<4x16xf32>
    %c0_16 = arith.constant 0 : index
    %c0_17 = arith.constant 0 : index
    %c0_18 = arith.constant 0 : index
    %20 = vector.load %arg4[%c0_16, %c0_17, %c0_18] : memref<1x32x16xf32, #tpu.memory_space<vmem>>, vector<1x32x16xf32>
    %21 = vector.shape_cast %20 : vector<1x32x16xf32> to vector<32x16xf32>
    %cst_19 = arith.constant dense<0.000000e+00> : vector<4x32xf32>
    %22 = tpu.matmul %19, %21, %cst_19 {dimension_numbers = #tpu.dot_dimension_numbers<[1], [1], [0], [0], [0, 0, 1, 0], [], []>} : vector<4x16xf32>, vector<32x16xf32>, vector<4x32xf32> -> vector<4x32xf32>
    %23 = vector.broadcast %5 : vector<1x32xf32> to vector<4x32xf32>
    %24 = arith.addf %22, %23 : vector<4x32xf32>
    %25 = arith.mulf %24, %24 : vector<4x32xf32>
    %cst_20 = arith.constant dense<0.000000e+00> : vector<4xf32>
    %26 = vector.multi_reduction <add>, %25, %cst_20 [1] : vector<4x32xf32> to vector<4xf32>
    %27 = vector.shape_cast %26 : vector<4xf32> to vector<4x1xf32>
    %28 = math.sqrt %27 : vector<4x1xf32>
    %cst_21 = arith.constant 9.99999993E-9 : f32
    %29 = vector.broadcast %cst_21 : f32 to vector<4x1xf32>
    %30 = arith.addf %28, %29 : vector<4x1xf32>
    %31 = tpu.reciprocal %30 {approx = true} : vector<4x1xf32> -> vector<4x1xf32>
    %32 = vector.broadcast %31 : vector<4x1xf32> to vector<4x32xf32>
    %33 = arith.mulf %24, %32 : vector<4x32xf32>
    %c0_22 = arith.constant 0 : index
    %c0_23 = arith.constant 0 : index
    %c0_24 = arith.constant 0 : index
    %34 = vector.load %arg8[%c0_22, %c0_23, %c0_24] : memref<1x4x32xf32, #tpu.memory_space<vmem>>, vector<1x4x32xf32>
    %35 = vector.shape_cast %34 : vector<1x4x32xf32> to vector<4x32xf32>
    %36 = vector.shape_cast %33 : vector<4x32xf32> to vector<1x4x32xf32>
    tpu.vector_store %arg8[%c0_22, %c0_23, %c0_24], %36 {strides = array<i32>} : memref<1x4x32xf32, #tpu.memory_space<vmem>>, vector<1x4x32xf32>,
    %c0_25 = arith.constant 0 : index
    %c0_26 = arith.constant 0 : index
    %37 = vector.load %arg6[%c0_25, %c0_26] : memref<8x32xf32, #tpu.memory_space<vmem>>, vector<8x32xf32>
    %38 = arith.mulf %37, %37 : vector<8x32xf32>
    %cst_27 = arith.constant dense<0.000000e+00> : vector<8xf32>
    %39 = vector.multi_reduction <add>, %38, %cst_27 [1] : vector<8x32xf32> to vector<8xf32>
    %40 = vector.shape_cast %39 : vector<8xf32> to vector<8x1xf32>
    %41 = math.sqrt %40 : vector<8x1xf32>
    %cst_28 = arith.constant 9.99999993E-9 : f32
    %42 = vector.broadcast %cst_28 : f32 to vector<8x1xf32>
    %43 = arith.addf %41, %42 : vector<8x1xf32>
    %44 = tpu.reciprocal %43 {approx = true} : vector<8x1xf32> -> vector<8x1xf32>
    %45 = vector.broadcast %44 : vector<8x1xf32> to vector<8x32xf32>
    %46 = arith.mulf %37, %45 : vector<8x32xf32>
    %cst_29 = arith.constant dense<0.000000e+00> : vector<4x8xf32>
    %47 = tpu.matmul %33, %46, %cst_29 {dimension_numbers = #tpu.dot_dimension_numbers<[1], [1], [0], [0], [0, 0, 1, 0], [], []>} : vector<4x32xf32>, vector<8x32xf32>, vector<4x8xf32> -> vector<4x8xf32>
    %48 = vector.broadcast %6 : vector<1x8xf32> to vector<4x8xf32>
    %49 = arith.addf %47, %48 : vector<4x8xf32>
    %c0_30 = arith.constant 0 : index
    %c0_31 = arith.constant 0 : index
    %c0_32 = arith.constant 0 : index
    %50 = vector.load %arg9[%c0_30, %c0_31, %c0_32] : memref<1x4x8xf32, #tpu.memory_space<vmem>>, vector<1x4x8xf32>
    %51 = vector.shape_cast %50 : vector<1x4x8xf32> to vector<4x8xf32>
    %52 = vector.shape_cast %49 : vector<4x8xf32> to vector<1x4x8xf32>
    tpu.vector_store %arg9[%c0_30, %c0_31, %c0_32], %52 {strides = array<i32>} : memref<1x4x8xf32, #tpu.memory_space<vmem>>, vector<1x4x8xf32>,
    return
  }
  func.func @transform_0(%arg0: i32) -> (i32, i32, i32) {
    %c0_i32 = arith.constant 0 : i32
    %c0_i32_0 = arith.constant 0 : i32
    %c0_i32_1 = arith.constant 0 : i32
    return %arg0, %c0_i32, %c0_i32_0 : i32, i32, i32
  }
  func.func @transform_1(%arg0: i32) -> (i32, i32, i32) {
    %c0_i32 = arith.constant 0 : i32
    %c0_i32_0 = arith.constant 0 : i32
    %c0_i32_1 = arith.constant 0 : i32
    return %arg0, %c0_i32, %c0_i32_0 : i32, i32, i32
  }
  func.func @transform_2(%arg0: i32) -> (i32, i32, i32) {
    %c0_i32 = arith.constant 0 : i32
    %c0_i32_0 = arith.constant 0 : i32
    %c0_i32_1 = arith.constant 0 : i32
    return %arg0, %c0_i32, %c0_i32_0 : i32, i32, i32
  }
  func.func @transform_3(%arg0: i32) -> (i32, i32, i32) {
    %c0_i32 = arith.constant 0 : i32
    %c0_i32_0 = arith.constant 0 : i32
    %c0_i32_1 = arith.constant 0 : i32
    return %arg0, %c0_i32, %c0_i32_0 : i32, i32, i32
  }
  func.func @transform_4(%arg0: i32) -> (i32, i32, i32) {
    %c0_i32 = arith.constant 0 : i32
    %c0_i32_0 = arith.constant 0 : i32
    %c0_i32_1 = arith.constant 0 : i32
    return %arg0, %c0_i32, %c0_i32_0 : i32, i32, i32
  }
  func.func @transform_5(%arg0: i32) -> (i32, i32) {
    %c0_i32 = arith.constant 0 : i32
    %c0_i32_0 = arith.constant 0 : i32
    %c0_i32_1 = arith.constant 0 : i32
    return %c0_i32, %c0_i32_0 : i32, i32
  }
  func.func @transform_6(%arg0: i32) -> (i32, i32) {
    %c0_i32 = arith.constant 0 : i32
    %c0_i32_0 = arith.constant 0 : i32
    %c0_i32_1 = arith.constant 0 : i32
    return %c0_i32, %c0_i32_0 : i32, i32
  }
  func.func @transform_7(%arg0: i32) -> (i32, i32, i32) {
    %c0_i32 = arith.constant 0 : i32
    %c0_i32_0 = arith.constant 0 : i32
    %c0_i32_1 = arith.constant 0 : i32
    return %arg0, %c0_i32, %c0_i32_0 : i32, i32, i32
  }
  func.func @transform_8(%arg0: i32) -> (i32, i32, i32) {
    %c0_i32 = arith.constant 0 : i32
    %c0_i32_0 = arith.constant 0 : i32
    %c0_i32_1 = arith.constant 0 : i32
    return %arg0, %c0_i32, %c0_i32_0 : i32, i32, i32
  }
}

</mosaic_0001>

<llo_original>
// kernel: model_forward.1
$region0: #{model_forward.1}
  #allocation0 [shape = 'u32[]', space=smem, size = 0x4, offset = 0x4, fixed_abs, tag = 'smem constant byte address 0x4 - core index']
  #allocation1 [shape = 'u32[144,128]{1,0:T(1,128)}', space=vmem, size = 0x12000, scoped, tag = 'internal scratch']
  %s0 = inlined_call_operand.vmem [shape: f32[2,4,32], index: 0, kind: input, shape index: {}]
  %s1 = inlined_call_operand.vmem [shape: f32[2,16,32], index: 1, kind: input, shape index: {}]
  %s2 = inlined_call_operand.vmem [shape: f32[2,1,16], index: 2, kind: input, shape index: {}]
  %s3 = inlined_call_operand.vmem [shape: f32[2,32,16], index: 3, kind: input, shape index: {}]
  %s4 = inlined_call_operand.vmem [shape: f32[2,1,32], index: 4, kind: input, shape index: {}]
  %s5 = inlined_call_operand.vmem [shape: f32[8,32], index: 5, kind: input, shape index: {}]
  %s6 = inlined_call_operand.vmem [shape: f32[1,8], index: 6, kind: input, shape index: {}]
  %s7 = inlined_call_operand.vmem [shape: f32[2,4,32], index: 7, kind: output, shape index: {0}]
  %s8 = inlined_call_operand.vmem [shape: f32[2,4,8], index: 8, kind: output, shape index: {1}]
  %9 = xla_tuple %s7, %s8
  %s10 = sld [smem:[#allocation0]]
  $region69: #{model_forward.1} parent=0
    _
  %s12 = ssub.s32 1, %s10
  %s13 = scalar_select 0, %s12, %s10
  loop: start=0, step=1, limit=4
  $region2: #{model_forward.1} parent=0 // loop_pre_header
    _
  $region3: #{model_forward.1} parent=0 // loop_header
    %s15 = sphi 0, %s19
    %p16 = scmp.ge.s32.totalorder %s15, 4
    %s25 = sphi 0, %s27
    %s28 = sphi 0, %s25
    %s29 = sphi 0, %s28
    %s45 = sphi 0, %s29
    %s51 = sphi 0, %s53
    %s54 = sphi 0, %s51
    %s55 = sphi 0, %s54
    %s71 = sphi 0, %s55
    %s77 = sphi 0, %s79
    %s80 = sphi 0, %s77
    %s81 = sphi 0, %s80
    %s97 = sphi 0, %s81
    %s103 = sphi 0, %s105
    %s106 = sphi 0, %s103
    %s107 = sphi 0, %s106
    %s123 = sphi 0, %s107
    %s129 = sphi 0, %s131
    %s132 = sphi 0, %s129
    %s133 = sphi 0, %s132
    %s149 = sphi 0, %s133
    %s153 = sphi 0, %s153
    %s155 = sphi 0, %s153
    %s156 = sphi 0, %s155
    %s170 = sphi 0, %s156
    %s174 = sphi 0, %s174
    %s176 = sphi 0, %s174
    %s177 = sphi 0, %s176
    %s191 = sphi 0, %s177
    %s197 = sphi 0, %s199
    %s200 = sphi 0, %s197
    %s201 = sphi 0, %s200
    %s217 = sphi 0, %s201
    %s223 = sphi 0, %s225
    %s226 = sphi 0, %s223
    %s227 = sphi 0, %s226
    %s243 = sphi 0, %s227
  $region4: #{model_forward.1} parent=0 // loop_header_branch
    %18 = sbr.rel (%p16) target = $region8
  $region5: #{model_forward.1} parent=0 // loop_body
    %s20 = ssub.s32 %s15, 1
    %s21 = ssub.s32 %s15, 2
    %s22 = sadd.s32 %s15, 1
    %s23 = ssub.s32 %s15, %s22
    %p24 = scmp.eq.s32.totalorder %s23, 0
    %s26 = sadd.s32 %s25, 1
    %s27 = scalar_select %p24, %s25, %s26
    %p30 = pneg %p24
    %p31 = scmp.eq.s32.totalorder %s15, 1
    %p32 = por %p30, %p31
    %p33 = scmp.ne.s32.totalorder %s25, %s28
    %p34 = scmp.eq.s32.totalorder %s15, 0
    %p35 = por %p33, %p34
    %p36 = scmp.ne.s32.totalorder %s25, %s28
    %p37 = scmp.eq.s32.totalorder %s20, 1
    %p38 = por %p36, %p37
    %p39 = scmp.ne.s32.totalorder %s28, %s29
    %p40 = scmp.eq.s32.totalorder %s20, 0
    %p41 = por %p39, %p40
    %p42 = scmp.ne.s32.totalorder %s28, %s29
    %p43 = scmp.eq.s32.totalorder %s21, 1
    %p44 = por %p42, %p43
    %p46 = scmp.ne.s32.totalorder %s29, %s45
    %p47 = scmp.eq.s32.totalorder %s21, 0
    %p48 = por %p46, %p47
    %s49 = ssub.s32 %s15, %s22
    %p50 = scmp.eq.s32.totalorder %s49, 0
    %s52 = sadd.s32 %s51, 1
    %s53 = scalar_select %p50, %s51, %s52
    %p56 = pneg %p50
    %p57 = scmp.eq.s32.totalorder %s15, 1
    %p58 = por %p56, %p57
    %p59 = scmp.ne.s32.totalorder %s51, %s54
    %p60 = scmp.eq.s32.totalorder %s15, 0
    %p61 = por %p59, %p60
    %p62 = scmp.ne.s32.totalorder %s51, %s54
    %p63 = scmp.eq.s32.totalorder %s20, 1
    %p64 = por %p62, %p63
    %p65 = scmp.ne.s32.totalorder %s54, %s55
    %p66 = scmp.eq.s32.totalorder %s20, 0
    %p67 = por %p65, %p66
    %p68 = scmp.ne.s32.totalorder %s54, %s55
    %p69 = scmp.eq.s32.totalorder %s21, 1
    %p70 = por %p68, %p69
    %p72 = scmp.ne.s32.totalorder %s55, %s71
    %p73 = scmp.eq.s32.totalorder %s21, 0
    %p74 = por %p72, %p73
    %s75 = ssub.s32 %s15, %s22
    %p76 = scmp.eq.s32.totalorder %s75, 0
    %s78 = sadd.s32 %s77, 1
    %s79 = scalar_select %p76, %s77, %s78
    %p82 = pneg %p76
    %p83 = scmp.eq.s32.totalorder %s15, 1
    %p84 = por %p82, %p83
    %p85 = scmp.ne.s32.totalorder %s77, %s80
    %p86 = scmp.eq.s32.totalorder %s15, 0
    %p87 = por %p85, %p86
    %p88 = scmp.ne.s32.totalorder %s77, %s80
    %p89 = scmp.eq.s32.totalorder %s20, 1
    %p90 = por %p88, %p89
    %p91 = scmp.ne.s32.totalorder %s80, %s81
    %p92 = scmp.eq.s32.totalorder %s20, 0
    %p93 = por %p91, %p92
    %p94 = scmp.ne.s32.totalorder %s80, %s81
    %p95 = scmp.eq.s32.totalorder %s21, 1
    %p96 = por %p94, %p95
    %p98 = scmp.ne.s32.totalorder %s81, %s97
    %p99 = scmp.eq.s32.totalorder %s21, 0
    %p100 = por %p98, %p99
    %s101 = ssub.s32 %s15, %s22
    %p102 = scmp.eq.s32.totalorder %s101, 0
    %s104 = sadd.s32 %s103, 1
    %s105 = scalar_select %p102, %s103, %s104
    %p108 = pneg %p102
    %p109 = scmp.eq.s32.totalorder %s15, 1
    %p110 = por %p108, %p109
    %p111 = scmp.ne.s32.totalorder %s103, %s106
    %p112 = scmp.eq.s32.totalorder %s15, 0
    %p113 = por %p111, %p112
    %p114 = scmp.ne.s32.totalorder %s103, %s106
    %p115 = scmp.eq.s32.totalorder %s20, 1
    %p116 = por %p114, %p115
    %p117 = scmp.ne.s32.totalorder %s106, %s107
    %p118 = scmp.eq.s32.totalorder %s20, 0
    %p119 = por %p117, %p118
    %p120 = scmp.ne.s32.totalorder %s106, %s107
    %p121 = scmp.eq.s32.totalorder %s21, 1
    %p122 = por %p120, %p121
    %p124 = scmp.ne.s32.totalorder %s107, %s123
    %p125 = scmp.eq.s32.totalorder %s21, 0
    %p126 = por %p124, %p125
    %s127 = ssub.s32 %s15, %s22
    %p128 = scmp.eq.s32.totalorder %s127, 0
    %s130 = sadd.s32 %s129, 1
    %s131 = scalar_select %p128, %s129, %s130
    %p134 = pneg %p128
    %p135 = scmp.eq.s32.totalorder %s15, 1
    %p136 = por %p134, %p135
    %p137 = scmp.ne.s32.totalorder %s129, %s132
    %p138 = scmp.eq.s32.totalorder %s15, 0
    %p139 = por %p137, %p138
    %p140 = scmp.ne.s32.totalorder %s129, %s132
    %p141 = scmp.eq.s32.totalorder %s20, 1
    %p142 = por %p140, %p141
    %p143 = scmp.ne.s32.totalorder %s132, %s133
    %p144 = scmp.eq.s32.totalorder %s20, 0
    %p145 = por %p143, %p144
    %p146 = scmp.ne.s32.totalorder %s132, %s133
    %p147 = scmp.eq.s32.totalorder %s21, 1
    %p148 = por %p146, %p147
    %p150 = scmp.ne.s32.totalorder %s133, %s149
    %p151 = scmp.eq.s32.totalorder %s21, 0
    %p152 = por %p150, %p151
    %s154 = sadd.s32 %s153, 1
    %p157 = scmp.eq.s32.totalorder %s15, 1
    %p158 = scmp.ne.s32.totalorder %s153, %s155
    %p159 = scmp.eq.s32.totalorder %s15, 0
    %p160 = por %p158, %p159
    %p161 = scmp.ne.s32.totalorder %s153, %s155
    %p162 = scmp.eq.s32.totalorder %s20, 1
    %p163 = por %p161, %p162
    %p164 = scmp.ne.s32.totalorder %s155, %s156
    %p165 = scmp.eq.s32.totalorder %s20, 0
    %p166 = por %p164, %p165
    %p167 = scmp.ne.s32.totalorder %s155, %s156
    %p168 = scmp.eq.s32.totalorder %s21, 1
    %p169 = por %p167, %p168
    %p171 = scmp.ne.s32.totalorder %s156, %s170
    %p172 = scmp.eq.s32.totalorder %s21, 0
    %p173 = por %p171, %p172
    %s175 = sadd.s32 %s174, 1
    %p178 = scmp.eq.s32.totalorder %s15, 1
    %p179 = scmp.ne.s32.totalorder %s174, %s176
    %p180 = scmp.eq.s32.totalorder %s15, 0
    %p181 = por %p179, %p180
    %p182 = scmp.ne.s32.totalorder %s174, %s176
    %p183 = scmp.eq.s32.totalorder %s20, 1
    %p184 = por %p182, %p183
    %p185 = scmp.ne.s32.totalorder %s176, %s177
    %p186 = scmp.eq.s32.totalorder %s20, 0
    %p187 = por %p185, %p186
    %p188 = scmp.ne.s32.totalorder %s176, %s177
    %p189 = scmp.eq.s32.totalorder %s21, 1
    %p190 = por %p188, %p189
    %p192 = scmp.ne.s32.totalorder %s177, %s191
    %p193 = scmp.eq.s32.totalorder %s21, 0
    %p194 = por %p192, %p193
    %s195 = ssub.s32 %s15, %s22
    %p196 = scmp.eq.s32.totalorder %s195, 0
    %s198 = sadd.s32 %s197, 1
    %s199 = scalar_select %p196, %s197, %s198
    %p202 = pneg %p196
    %p203 = scmp.eq.s32.totalorder %s15, 1
    %p204 = por %p202, %p203
    %p205 = scmp.ne.s32.totalorder %s197, %s200
    %p206 = scmp.eq.s32.totalorder %s15, 0
    %p207 = por %p205, %p206
    %p208 = scmp.ne.s32.totalorder %s197, %s200
    %p209 = scmp.eq.s32.totalorder %s20, 1
    %p210 = por %p208, %p209
    %p211 = scmp.ne.s32.totalorder %s200, %s201
    %p212 = scmp.eq.s32.totalorder %s20, 0
    %p213 = por %p211, %p212
    %p214 = scmp.ne.s32.totalorder %s200, %s201
    %p215 = scmp.eq.s32.totalorder %s21, 1
    %p216 = por %p214, %p215
    %p218 = scmp.ne.s32.totalorder %s201, %s217
    %p219 = scmp.eq.s32.totalorder %s21, 0
    %p220 = por %p218, %p219
    %s221 = ssub.s32 %s15, %s22
    %p222 = scmp.eq.s32.totalorder %s221, 0
    %s224 = sadd.s32 %s223, 1
    %s225 = scalar_select %p222, %s223, %s224
    %p228 = pneg %p222
    %p229 = scmp.eq.s32.totalorder %s15, 1
    %p230 = por %p228, %p229
    %p231 = scmp.ne.s32.totalorder %s223, %s226
    %p232 = scmp.eq.s32.totalorder %s15, 0
    %p233 = por %p231, %p232
    %p234 = scmp.ne.s32.totalorder %s223, %s226
    %p235 = scmp.eq.s32.totalorder %s20, 1
    %p236 = por %p234, %p235
    %p237 = scmp.ne.s32.totalorder %s226, %s227
    %p238 = scmp.eq.s32.totalorder %s20, 0
    %p239 = por %p237, %p238
    %p240 = scmp.ne.s32.totalorder %s226, %s227
    %p241 = scmp.eq.s32.totalorder %s21, 1
    %p242 = por %p240, %p241
    %p244 = scmp.ne.s32.totalorder %s227, %s243
    %p245 = scmp.eq.s32.totalorder %s21, 0
    %p246 = por %p244, %p245
    %p247 = scmp.le.s32.totalorder 1, %s15
    %p248 = scmp.lt.s32.totalorder %s15, 3
    %p249 = pnand %p247, %p248
    %p250 = pneg %p249
    // Predicated region
    $region9: #{model_forward.1} parent=5 // pred_check
      _
    $region10: #{model_forward.1} parent=5 // pred_check_branch
      %252 = sbr.rel (%p249) target = $region12
    $region11: #{model_forward.1} parent=5 // pred_region
      %s253 = ssub.s32 %s15, 1
      // Predicated region
      $region13: #{model_forward.1} parent=11 // pred_check
        %p254 = pneg %p166
      $region14: #{model_forward.1} parent=11 // pred_check_branch
        %256 = sbr.rel (%p254) target = $region16
      $region15: #{model_forward.1} parent=11 // pred_region
        _
      $region16: #{model_forward.1} parent=11 // pred_fallthru
        _
      // Predicated region
      $region17: #{model_forward.1} parent=11 // pred_check
        %p257 = pneg %p187
      $region18: #{model_forward.1} parent=11 // pred_check_branch
        %259 = sbr.rel (%p257) target = $region20
      $region19: #{model_forward.1} parent=11 // pred_region
        _
      $region20: #{model_forward.1} parent=11 // pred_fallthru
        _
    $region12: #{model_forward.1} parent=5 // pred_fallthru
      _
    %p260 = scmp.lt.s32.totalorder %s15, 2
    // Predicated region
    $region21: #{model_forward.1} parent=5 // pred_check
      %p261 = pneg %p260
    $region22: #{model_forward.1} parent=5 // pred_check_branch
      %263 = sbr.rel (%p261) target = $region24
    $region23: #{model_forward.1} parent=5 // pred_region
      // Predicated region
      $region25: #{model_forward.1} parent=23 // pred_check
        %p264 = pneg %p35
      $region26: #{model_forward.1} parent=23 // pred_check_branch
        %266 = sbr.rel (%p264) target = $region28
      $region27: #{model_forward.1} parent=23 // pred_region
        %p267 = scmp.lt.s32.totalorder %s15, 1
        %s268 = scalar_select %p267, %s15, 1
        %s269 = smul.addr %s268, 4
        %s270 = scalar_lea.vmem %s0, %s269
      $region28: #{model_forward.1} parent=23 // pred_fallthru
        _
      // Predicated region
      $region29: #{model_forward.1} parent=23 // pred_check
        %p271 = pneg %p61
      $region30: #{model_forward.1} parent=23 // pred_check_branch
        %273 = sbr.rel (%p271) target = $region32
      $region31: #{model_forward.1} parent=23 // pred_region
        %p274 = scmp.lt.s32.totalorder %s15, 1
        %s275 = scalar_select %p274, %s15, 1
        %s276 = smul.addr %s275, 2
        %s277 = smul.addr %s276, 8
        %s278 = scalar_lea.vmem %s1, %s277
      $region32: #{model_forward.1} parent=23 // pred_fallthru
        _
      // Predicated region
      $region33: #{model_forward.1} parent=23 // pred_check
        %p279 = pneg %p87
      $region34: #{model_forward.1} parent=23 // pred_check_branch
        %281 = sbr.rel (%p279) target = $region36
      $region35: #{model_forward.1} parent=23 // pred_region
        %p282 = scmp.lt.s32.totalorder %s15, 1
        %s283 = scalar_select %p282, %s15, 1
        %s284 = scalar_lea.vmem %s2, %s283
      $region36: #{model_forward.1} parent=23 // pred_fallthru
        _
      // Predicated region
      $region37: #{model_forward.1} parent=23 // pred_check
        %p285 = pneg %p113
      $region38: #{model_forward.1} parent=23 // pred_check_branch
        %287 = sbr.rel (%p285) target = $region40
      $region39: #{model_forward.1} parent=23 // pred_region
        %p288 = scmp.lt.s32.totalorder %s15, 1
        %s289 = scalar_select %p288, %s15, 1
        %s290 = smul.addr %s289, 4
        %s291 = smul.addr %s290, 8
        %s292 = scalar_lea.vmem %s3, %s291
      $region40: #{model_forward.1} parent=23 // pred_fallthru
        _
      // Predicated region
      $region41: #{model_forward.1} parent=23 // pred_check
        %p293 = pneg %p139
      $region42: #{model_forward.1} parent=23 // pred_check_branch
        %295 = sbr.rel (%p293) target = $region44
      $region43: #{model_forward.1} parent=23 // pred_region
        %p296 = scmp.lt.s32.totalorder %s15, 1
        %s297 = scalar_select %p296, %s15, 1
        %s298 = scalar_lea.vmem %s4, %s297
      $region44: #{model_forward.1} parent=23 // pred_fallthru
        _
    $region24: #{model_forward.1} parent=5 // pred_fallthru
      _
    %p299 = scmp.le.s32.totalorder 1, %s15
    %p300 = scmp.lt.s32.totalorder %s15, 3
    %p301 = pnand %p299, %p300
    %p302 = pneg %p301
    // Predicated region
    $region45: #{model_forward.1} parent=5 // pred_check
      _
    $region46: #{model_forward.1} parent=5 // pred_check_branch
      %304 = sbr.rel (%p301) target = $region48
    $region47: #{model_forward.1} parent=5 // pred_region
      %s305 = ssub.s32 %s15, 1
      %p306 = scmp.lt.s32.totalorder %s20, 1
      %s307 = scalar_select %p306, %s20, 1
      %s308 = smul.addr %s307, 4
      %s309 = scalar_lea.vmem %s0, %s308
      %p310 = pneg %p41
      %p311 = pneg %p38
      %p312 = scmp.lt.s32.totalorder %s20, 1
      %s313 = scalar_select %p312, %s20, 1
      %s314 = smul.addr %s313, 2
      %s315 = smul.addr %s314, 8
      %s316 = scalar_lea.vmem %s1, %s315
      %p317 = pneg %p67
      %p318 = pneg %p64
      %p319 = scmp.lt.s32.totalorder %s20, 1
      %s320 = scalar_select %p319, %s20, 1
      %s321 = scalar_lea.vmem %s2, %s320
      %p322 = pneg %p93
      %p323 = pneg %p90
      %p324 = scmp.lt.s32.totalorder %s20, 1
      %s325 = scalar_select %p324, %s20, 1
      %s326 = smul.addr %s325, 4
      %s327 = smul.addr %s326, 8
      %s328 = scalar_lea.vmem %s3, %s327
      %p329 = pneg %p119
      %p330 = pneg %p116
      %p331 = scmp.lt.s32.totalorder %s20, 1
      %s332 = scalar_select %p331, %s20, 1
      %s333 = scalar_lea.vmem %s4, %s332
      %p334 = pneg %p145
      %p335 = pneg %p142
      %p336 = pneg %p166
      %p337 = pneg %p163
      %p338 = pneg %p187
      %p339 = pneg %p184
      %p340 = pneg %p213
      %p341 = pneg %p210
      %p342 = scmp.lt.s32.totalorder %s20, 1
      %s343 = scalar_select %p342, %s20, 1
      %s344 = smul.addr %s343, 4
      %s345 = scalar_lea.vmem %s7, %s344
      %p346 = pneg %p239
      %p347 = pneg %p236
      %p348 = scmp.lt.s32.totalorder %s20, 1
      %s349 = scalar_select %p348, %s20, 1
      %s350 = smul.addr %s349, 4
      %s351 = scalar_lea.vmem %s8, %s350
      %p352 = scmp.lt.s32.totalorder %s20, 1
      %s353 = scalar_select %p352, %s20, 1
      %s354 = smul.addr %s353, 4
      %s355 = scalar_lea.vmem %s0, %s354
      %p356 = scmp.lt.s32.totalorder %s20, 1
      %s357 = scalar_select %p356, %s20, 1
      %s358 = smul.addr %s357, 2
      %s359 = smul.addr %s358, 8
      %s360 = scalar_lea.vmem %s1, %s359
      %p361 = scmp.lt.s32.totalorder %s20, 1
      %s362 = scalar_select %p361, %s20, 1
      %s363 = scalar_lea.vmem %s2, %s362
      %p364 = scmp.lt.s32.totalorder %s20, 1
      %s365 = scalar_select %p364, %s20, 1
      %s366 = smul.addr %s365, 4
      %s367 = smul.addr %s366, 8
      %s368 = scalar_lea.vmem %s3, %s367
      %p369 = scmp.lt.s32.totalorder %s20, 1
      %s370 = scalar_select %p369, %s20, 1
      %s371 = scalar_lea.vmem %s4, %s370
      %p372 = scmp.lt.s32.totalorder %s20, 1
      %s373 = scalar_select %p372, %s20, 1
      %s374 = smul.addr %s373, 4
      %s375 = scalar_lea.vmem %s7, %s374
      %p376 = scmp.lt.s32.totalorder %s20, 1
      %s377 = scalar_select %p376, %s20, 1
      %s378 = smul.addr %s377, 4
      %s379 = scalar_lea.vmem %s8, %s378
      %v380 = vld [vmem:[%s355] sm:$0xf]
      %v381 = vld [vmem:[%s363] sm:$0x1]
      %v382 = vld [vmem:[%s371] sm:$0x1]
      %v383 = vld [vmem:[%s6] sm:$0x1]
      %v384 = vld [vmem:[%s360] sm:$0xff]
      %v385 = vld [vmem:[%s360 + $0x8] sm:$0xff]
      %v387 = vlaneseq
      %v388 = vshrl.u32 %v387, 7
      %v389 = vsub.s32 0, %v388
      %v390 = vrot.slane %v381, %v389
      %vm392 = vcmask 261120
      %v394 = vsel %vm392, %v380, 0
      %v397 = vsel %vm392, %v384, 0
      %v400 = vsel %vm392, %v385, 0
      %402 = vmatprep.subr.mxu0 0.0
      %403 = vmatpush1.xpose.msra.mxu0 0.0
      %404 = vmatprep.subr.mxu0 0.0
      %405 = vmatpush1.xpose.msra.mxu0 0.0
      %406 = vmatprep.subr.mxu0 0.0
      %407 = vmatpush1.xpose.msra.mxu0 0.0
      %408 = vmatprep.subr.mxu0 0.0
      %409 = vmatpush1.xpose.msra.mxu0 0.0
      %410 = vmatprep.subr.mxu0 0.0
      %411 = vmatpush1.xpose.msra.mxu0 0.0
      %412 = vmatprep.subr.mxu0 0.0
      %413 = vmatpush1.xpose.msra.mxu0 0.0
      %414 = vmatprep.subr.mxu0 0.0
      %415 = vmatpush1.xpose.msra.mxu0 0.0
      %416 = vmatprep.subr.mxu0 0.0
      %417 = vmatpush1.xpose.msra.mxu0 0.0
      %418 = vmatprep.subr.mxu0 0.0
      %419 = vmatpush1.xpose.msra.mxu0 0.0
      %420 = vmatprep.subr.mxu0 0.0
      %421 = vmatpush1.xpose.msra.mxu0 0.0
      %422 = vmatprep.subr.mxu0 0.0
      %423 = vmatpush1.xpose.msra.mxu0 0.0
      %424 = vmatprep.subr.mxu0 0.0
      %425 = vmatpush1.xpose.msra.mxu0 0.0
      %426 = vmatprep.subr.mxu0 0.0
      %427 = vmatpush1.xpose.msra.mxu0 0.0
      %428 = vmatprep.subr.mxu0 0.0
      %429 = vmatpush1.xpose.msra.mxu0 0.0
      %430 = vmatprep.subr.mxu0 0.0
      %431 = vmatpush1.xpose.msra.mxu0 %v400
      %432 = vmatprep.subr.mxu0 0.0
      %433 = vmatpush1.xpose.msra.mxu0 %v397
      %434 = vmatprep.subr.mxu0 0.0
      %435 = vmatpush2.xpose.msra.mxu0 0.0
      %436 = vmatprep.subr.mxu0 0.0
      %437 = vmatpush2.xpose.msra.mxu0 0.0
      %438 = vmatprep.subr.mxu0 0.0
      %439 = vmatpush2.xpose.msra.mxu0 0.0
      %440 = vmatprep.subr.mxu0 0.0
      %441 = vmatpush2.xpose.msra.mxu0 0.0
      %442 = vmatprep.subr.mxu0 0.0
      %443 = vmatpush2.xpose.msra.mxu0 0.0
      %444 = vmatprep.subr.mxu0 0.0
      %445 = vmatpush2.xpose.msra.mxu0 0.0
      %446 = vmatprep.subr.mxu0 0.0
      %447 = vmatpush2.xpose.msra.mxu0 0.0
      %448 = vmatprep.subr.mxu0 0.0
      %449 = vmatpush2.xpose.msra.mxu0 0.0
      %450 = vmatprep.subr.mxu0 0.0
      %451 = vmatpush2.xpose.msra.mxu0 0.0
      %452 = vmatprep.subr.mxu0 0.0
      %453 = vmatpush2.xpose.msra.mxu0 0.0
      %454 = vmatprep.subr.mxu0 0.0
      %455 = vmatpush2.xpose.msra.mxu0 0.0
      %456 = vmatprep.subr.mxu0 0.0
      %457 = vmatpush2.xpose.msra.mxu0 0.0
      %458 = vmatprep.subr.mxu0 0.0
      %459 = vmatpush2.xpose.msra.mxu0 0.0
      %460 = vmatprep.subr.mxu0 0.0
      %461 = vmatpush2.xpose.msra.mxu0 0.0
      %462 = vmatprep.subr.mxu0 0.0
      %463 = vmatpush2.xpose.msra.mxu0 0.0
      %464 = vmatprep.subr.mxu0 0.0
      %465 = vmatpush2.xpose.msra.mxu0 0.0
      %466 = vmatprep.mubr.f32.mxu0 0.0
      %467 = vmatmul.mubr.f32.gmra.mxu0 %v394
      %v468 = vpop.f32.mrf.mxu0
      %v469 = vadd.f32 %v390, %v468
      %v470 = vpop.f32.mrf.mxu0
      %471 = vdwg.mxu0
      %v472 = vmul.f32 %v469, 0.5
      %v473 = vmul.f32 %v469, 0.70710677
      %v474 = verf.f32.pop %v473
      %v475 = vadd.f32 %v474, 1.0
      %v476 = vmul.f32 %v472, %v475
      %v477 = vld [vmem:[%s368] sm:$0xff]
      %v478 = vld [vmem:[%s368 + $0x8] sm:$0xff]
      %v479 = vld [vmem:[%s368 + $0x10] sm:$0xff]
      %v480 = vld [vmem:[%s368 + $0x18] sm:$0xff]
      %v482 = vlaneseq
      %v483 = vshrl.u32 %v482, 7
      %v484 = vsub.s32 0, %v483
      %v485 = vrot.slane %v382, %v484
      %vm487 = vcmask 130048
      %v489 = vsel %vm487, %v476, 0
      %v492 = vsel %vm487, %v477, 0
      %v495 = vsel %vm487, %v478, 0
      %v498 = vsel %vm487, %v479, 0
      %v501 = vsel %vm487, %v480, 0
      %503 = vmatprep.subr.mxu0 0.0
      %504 = vmatpush1.xpose.msra.mxu0 0.0
      %505 = vmatprep.subr.mxu0 0.0
      %506 = vmatpush1.xpose.msra.mxu0 0.0
      %507 = vmatprep.subr.mxu0 0.0
      %508 = vmatpush1.xpose.msra.mxu0 0.0
      %509 = vmatprep.subr.mxu0 0.0
      %510 = vmatpush1.xpose.msra.mxu0 0.0
      %511 = vmatprep.subr.mxu0 0.0
      %512 = vmatpush1.xpose.msra.mxu0 0.0
      %513 = vmatprep.subr.mxu0 0.0
      %514 = vmatpush1.xpose.msra.mxu0 0.0
      %515 = vmatprep.subr.mxu0 0.0
      %516 = vmatpush1.xpose.msra.mxu0 0.0
      %517 = vmatprep.subr.mxu0 0.0
      %518 = vmatpush1.xpose.msra.mxu0 0.0
      %519 = vmatprep.subr.mxu0 0.0
      %520 = vmatpush1.xpose.msra.mxu0 0.0
      %521 = vmatprep.subr.mxu0 0.0
      %522 = vmatpush1.xpose.msra.mxu0 0.0
      %523 = vmatprep.subr.mxu0 0.0
      %524 = vmatpush1.xpose.msra.mxu0 0.0
      %525 = vmatprep.subr.mxu0 0.0
      %526 = vmatpush1.xpose.msra.mxu0 0.0
      %527 = vmatprep.subr.mxu0 0.0
      %528 = vmatpush1.xpose.msra.mxu0 %v501
      %529 = vmatprep.subr.mxu0 0.0
      %530 = vmatpush1.xpose.msra.mxu0 %v498
      %531 = vmatprep.subr.mxu0 0.0
      %532 = vmatpush1.xpose.msra.mxu0 %v495
      %533 = vmatprep.subr.mxu0 0.0
      %534 = vmatpush1.xpose.msra.mxu0 %v492
      %535 = vmatprep.subr.mxu0 0.0
      %536 = vmatpush2.xpose.msra.mxu0 0.0
      %537 = vmatprep.subr.mxu0 0.0
      %538 = vmatpush2.xpose.msra.mxu0 0.0
      %539 = vmatprep.subr.mxu0 0.0
      %540 = vmatpush2.xpose.msra.mxu0 0.0
      %541 = vmatprep.subr.mxu0 0.0
      %542 = vmatpush2.xpose.msra.mxu0 0.0
      %543 = vmatprep.subr.mxu0 0.0
      %544 = vmatpush2.xpose.msra.mxu0 0.0
      %545 = vmatprep.subr.mxu0 0.0
      %546 = vmatpush2.xpose.msra.mxu0 0.0
      %547 = vmatprep.subr.mxu0 0.0
      %548 = vmatpush2.xpose.msra.mxu0 0.0
      %549 = vmatprep.subr.mxu0 0.0
      %550 = vmatpush2.xpose.msra.mxu0 0.0
      %551 = vmatprep.subr.mxu0 0.0
      %552 = vmatpush2.xpose.msra.mxu0 0.0
      %553 = vmatprep.subr.mxu0 0.0
      %554 = vmatpush2.xpose.msra.mxu0 0.0
      %555 = vmatprep.subr.mxu0 0.0
      %556 = vmatpush2.xpose.msra.mxu0 0.0
      %557 = vmatprep.subr.mxu0 0.0
      %558 = vmatpush2.xpose.msra.mxu0 0.0
      %559 = vmatprep.subr.mxu0 0.0
      %560 = vmatpush2.xpose.msra.mxu0 0.0
      %561 = vmatprep.subr.mxu0 0.0
      %562 = vmatpush2.xpose.msra.mxu0 0.0
      %563 = vmatprep.subr.mxu0 0.0
      %564 = vmatpush2.xpose.msra.mxu0 0.0
      %565 = vmatprep.subr.mxu0 0.0
      %566 = vmatpush2.xpose.msra.mxu0 0.0
      %567 = vmatprep.mubr.f32.mxu0 0.0
      %568 = vmatmul.mubr.f32.gmra.mxu0 %v489
      %v569 = vpop.f32.mrf.mxu0
      %v570 = vadd.f32 %v485, %v569
      %v571 = vpop.f32.mrf.mxu0
      %572 = vdwg.mxu0
      %v573 = vmul.f32 %v570, %v570
      %vm574 = vcmask 257024
      %v575 = vsel %vm574, %v573, 0.0
      %576 = vadd.xlane.f32.xlu0 %v575
      %v577 = vpop.xlane.xlu0 %576
      %v578 = vrsqrt.pop %v577
      %v579 = vmul.f32 %v577, %v578
      %vm580 = vcmp.eq.f32.partialorder %v577, inf
      %v581 = vsel %vm580, %v577, %v579
      %vm582 = vcmp.eq.f32.partialorder %v577, 0.0
      %v583 = vand.u32 %v577, 2147483648
      %v584 = vsel %vm582, %v583, %v581
      %v585 = vadd.f32 %v584, 1e-08
      %v586 = vrcp.pop %v585
      %v587 = vmul.f32 %v570, %v586
      %588 = vst.msk [vmem:[%s375] sm:$0xf] %vm574, %v587
      %v589 = vld [vmem:[%s5] sm:$0xff]
      %v590 = vmul.f32 %v589, %v589
      %v591 = vsel %vm392, %v590, 0.0
      %592 = vadd.xlane.f32.xlu0 %v591
      %v593 = vpop.xlane.xlu0 %592
      %v594 = vrsqrt.pop %v593
      %v595 = vmul.f32 %v593, %v594
      %vm596 = vcmp.eq.f32.partialorder %v593, inf
      %v597 = vsel %vm596, %v593, %v595
      %vm598 = vcmp.eq.f32.partialorder %v593, 0.0
      %v599 = vand.u32 %v593, 2147483648
      %v600 = vsel %vm598, %v599, %v597
      %v601 = vadd.f32 %v600, 1e-08
      %v602 = vrcp.pop %v601
      %v603 = vmul.f32 %v589, %v602
      %v605 = vlaneseq
      %v606 = vshrl.u32 %v605, 7
      %v607 = vsub.s32 0, %v606
      %v608 = vrot.slane %v383, %v607
      %v611 = vsel %vm392, %v587, 0
      %v614 = vsel %vm392, %v603, 0
      %616 = vmatprep.subr.mxu0 0.0
      %617 = vmatpush1.xpose.msra.mxu0 0.0
      %618 = vmatprep.subr.mxu0 0.0
      %619 = vmatpush1.xpose.msra.mxu0 0.0
      %620 = vmatprep.subr.mxu0 0.0
      %621 = vmatpush1.xpose.msra.mxu0 0.0
      %622 = vmatprep.subr.mxu0 0.0
      %623 = vmatpush1.xpose.msra.mxu0 0.0
      %624 = vmatprep.subr.mxu0 0.0
      %625 = vmatpush1.xpose.msra.mxu0 0.0
      %626 = vmatprep.subr.mxu0 0.0
      %627 = vmatpush1.xpose.msra.mxu0 0.0
      %628 = vmatprep.subr.mxu0 0.0
      %629 = vmatpush1.xpose.msra.mxu0 0.0
      %630 = vmatprep.subr.mxu0 0.0
      %631 = vmatpush1.xpose.msra.mxu0 0.0
      %632 = vmatprep.subr.mxu0 0.0
      %633 = vmatpush1.xpose.msra.mxu0 0.0
      %634 = vmatprep.subr.mxu0 0.0
      %635 = vmatpush1.xpose.msra.mxu0 0.0
      %636 = vmatprep.subr.mxu0 0.0
      %637 = vmatpush1.xpose.msra.mxu0 0.0
      %638 = vmatprep.subr.mxu0 0.0
      %639 = vmatpush1.xpose.msra.mxu0 0.0
      %640 = vmatprep.subr.mxu0 0.0
      %641 = vmatpush1.xpose.msra.mxu0 0.0
      %642 = vmatprep.subr.mxu0 0.0
      %643 = vmatpush1.xpose.msra.mxu0 0.0
      %644 = vmatprep.subr.mxu0 0.0
      %645 = vmatpush1.xpose.msra.mxu0 0.0
      %646 = vmatprep.subr.mxu0 0.0
      %647 = vmatpush1.xpose.msra.mxu0 %v614
      %648 = vmatprep.subr.mxu0 0.0
      %649 = vmatpush2.xpose.msra.mxu0 0.0
      %650 = vmatprep.subr.mxu0 0.0
      %651 = vmatpush2.xpose.msra.mxu0 0.0
      %652 = vmatprep.subr.mxu0 0.0
      %653 = vmatpush2.xpose.msra.mxu0 0.0
      %654 = vmatprep.subr.mxu0 0.0
      %655 = vmatpush2.xpose.msra.mxu0 0.0
      %656 = vmatprep.subr.mxu0 0.0
      %657 = vmatpush2.xpose.msra.mxu0 0.0
      %658 = vmatprep.subr.mxu0 0.0
      %659 = vmatpush2.xpose.msra.mxu0 0.0
      %660 = vmatprep.subr.mxu0 0.0
      %661 = vmatpush2.xpose.msra.mxu0 0.0
      %662 = vmatprep.subr.mxu0 0.0
      %663 = vmatpush2.xpose.msra.mxu0 0.0
      %664 = vmatprep.subr.mxu0 0.0
      %665 = vmatpush2.xpose.msra.mxu0 0.0
      %666 = vmatprep.subr.mxu0 0.0
      %667 = vmatpush2.xpose.msra.mxu0 0.0
      %668 = vmatprep.subr.mxu0 0.0
      %669 = vmatpush2.xpose.msra.mxu0 0.0
      %670 = vmatprep.subr.mxu0 0.0
      %671 = vmatpush2.xpose.msra.mxu0 0.0
      %672 = vmatprep.subr.mxu0 0.0
      %673 = vmatpush2.xpose.msra.mxu0 0.0
      %674 = vmatprep.subr.mxu0 0.0
      %675 = vmatpush2.xpose.msra.mxu0 0.0
      %676 = vmatprep.subr.mxu0 0.0
      %677 = vmatpush2.xpose.msra.mxu0 0.0
      %678 = vmatprep.subr.mxu0 0.0
      %679 = vmatpush2.xpose.msra.mxu0 0.0
      %680 = vmatprep.mubr.f32.mxu0 0.0
      %681 = vmatmul.mubr.f32.gmra.mxu0 %v611
      %v682 = vpop.f32.mrf.mxu0
      %v683 = vadd.f32 %v608, %v682
      %v684 = vpop.f32.mrf.mxu0
      %685 = vdwg.mxu0
      %vm686 = vcmask 60416
      %687 = vst.msk [vmem:[%s379] sm:$0xf] %vm686, %v683
      %p688 = scmp.lt.s32.totalorder %s20, 1
      %s689 = scalar_select %p688, %s20, 1
      %s690 = smul.addr %s689, 4
      %s691 = scalar_lea.vmem %s7, %s690
      %p692 = scmp.lt.s32.totalorder %s20, 1
      %s693 = scalar_select %p692, %s20, 1
      %s694 = smul.addr %s693, 4
      %s695 = scalar_lea.vmem %s8, %s694
      // Predicated region
      $region49: #{model_forward.1} parent=47 // pred_check
        %p696 = pneg %p210
      $region50: #{model_forward.1} parent=47 // pred_check_branch
        %698 = sbr.rel (%p696) target = $region52
      $region51: #{model_forward.1} parent=47 // pred_region
        _
      $region52: #{model_forward.1} parent=47 // pred_fallthru
        _
      // Predicated region
      $region53: #{model_forward.1} parent=47 // pred_check
        %p699 = pneg %p236
      $region54: #{model_forward.1} parent=47 // pred_check_branch
        %701 = sbr.rel (%p699) target = $region56
      $region55: #{model_forward.1} parent=47 // pred_region
        _
      $region56: #{model_forward.1} parent=47 // pred_fallthru
        _
    $region48: #{model_forward.1} parent=5 // pred_fallthru
      _
    %p702 = scmp.le.s32.totalorder 2, %s15
    // Predicated region
    $region57: #{model_forward.1} parent=5 // pred_check
      %p703 = pneg %p702
    $region58: #{model_forward.1} parent=5 // pred_check_branch
      %705 = sbr.rel (%p703) target = $region60
    $region59: #{model_forward.1} parent=5 // pred_region
      %s706 = ssub.s32 %s15, 2
      // Predicated region
      $region61: #{model_forward.1} parent=59 // pred_check
        %p707 = pneg %p216
      $region62: #{model_forward.1} parent=59 // pred_check_branch
        %709 = sbr.rel (%p707) target = $region64
      $region63: #{model_forward.1} parent=59 // pred_region
        %p710 = scmp.lt.s32.totalorder %s21, 1
        %s711 = scalar_select %p710, %s21, 1
        %s712 = smul.addr %s711, 4
        %s713 = scalar_lea.vmem %s7, %s712
      $region64: #{model_forward.1} parent=59 // pred_fallthru
        _
      // Predicated region
      $region65: #{model_forward.1} parent=59 // pred_check
        %p714 = pneg %p242
      $region66: #{model_forward.1} parent=59 // pred_check_branch
        %716 = sbr.rel (%p714) target = $region68
      $region67: #{model_forward.1} parent=59 // pred_region
        %p717 = scmp.lt.s32.totalorder %s21, 1
        %s718 = scalar_select %p717, %s21, 1
        %s719 = smul.addr %s718, 4
        %s720 = scalar_lea.vmem %s8, %s719
      $region68: #{model_forward.1} parent=59 // pred_fallthru
        _
    $region60: #{model_forward.1} parent=5 // pred_fallthru
      _
  $region6: #{model_forward.1} parent=0 // loop_footer
    %s19 = sadd.s32 1, %s15
  $region7: #{model_forward.1} parent=0 // loop_footer_branch
    %14 = sbr.rel target = $region3
  $region8: #{model_forward.1} parent=0 // loop_exit
    _

</llo_original>
